<compile_context>
chip_gen: v6e
topology: v6e:2x2x1
jax: 0.10.0
libtpu: 0.0.40
codegen_flags: <defaults>
</compile_context>

<pallas_src>
import math

import jax
import jax.numpy as jnp
from jax.experimental import pallas as pl
from jax.experimental.pallas import tpu as pltpu

NEG_SLOPE = 0.2
GAIN = math.sqrt(2.0 / (1.0 + NEG_SLOPE ** 2))
NEG_GAIN = NEG_SLOPE * GAIN

# Tile targets: ~2 MiB f32 per x tile -> in+out double-buffered ~8 MiB VMEM.
_ROW_TILE_TARGET = 256     # sublane axis, multiple of 8
_LANE_TILE_TARGET = 2048   # lane axis, multiple of 128


def _pick_tile(full: int, unit: int, target: int) -> int:
    """Largest multiple of `unit` that divides `full`, capped at `target`.

    Falls back to the full extent (always a legal block size), so we never
    emit ragged tiles (which would force masked partial stores)."""
    if full <= unit or full % unit != 0:
        return full
    best = unit
    cap = min(target, full)
    t = unit
    while t <= cap:
        if full % t == 0:
            best = t
        t += unit
    return best


def _biased_activation_kernel(x_ref, b_ref, o_ref):
    # x_ref/o_ref: (TR, TL) tile of the flattened (N*C, H*W) activation.
    # b_ref:       (TR, 1) per-row (i.e. per-channel) bias column.
    y = x_ref[...] + b_ref[...]                      # broadcast bias over lanes
    scale = jnp.where(y >= 0, GAIN, NEG_GAIN)        # gain folded into select
    o_ref[...] = (y * scale).astype(o_ref.dtype)


def biased_activation(x: jax.Array, bias: jax.Array) -> jax.Array:
    """x: (N, C, H, W), bias: (C,) -> (N, C, H, W)."""
    N, C, H, W = x.shape
    HW = H * W
    NC = N * C

    # Pure reshapes (row-major contiguous): no data movement beyond the copy
    # XLA may need for the tiny bias expansion.
    x2 = x.reshape(NC, HW)
    b2 = jnp.broadcast_to(bias.reshape(1, C), (N, C)).reshape(NC, 1)

    tr = _pick_tile(NC, 8, _ROW_TILE_TARGET)
    tl = _pick_tile(HW, 128, _LANE_TILE_TARGET)
    grid = (NC // tr, HW // tl)

    out = pl.pallas_call(
        _biased_activation_kernel,
        out_shape=jax.ShapeDtypeStruct((NC, HW), x.dtype),
        grid_spec=pltpu.PrefetchScalarGridSpec(
            num_scalar_prefetch=0,
            grid=grid,
            in_specs=[
                pl.BlockSpec((tr, tl), lambda r, l: (r, l)),
                pl.BlockSpec((tr, 1), lambda r, l: (r, 0)),
            ],
            out_specs=pl.BlockSpec((tr, tl), lambda r, l: (r, l)),
        ),
        compiler_params=pltpu.CompilerParams(
            # No reduction axis; both axes can be sharded across TCs (v7x).
            dimension_semantics=("parallel", "parallel"),
        ),
    )(x2, b2)

    return out.reshape(N, C, H, W)


if __name__ == "__main__":
    key = jax.random.PRNGKey(0)
    kx, kb = jax.random.split(key)

    # Small shapes consistent with the module's NCHW conv-feature input.
    N, C, H, W = 2, 4, 16, 16
    x = jax.random.normal(kx, (N, C, H, W), dtype=jnp.float32)
    # nn.Parameter(torch.zeros(Channels)) -> shape (C,). Use a deterministic
    # nonzero init so the per-channel broadcast path is actually exercised.
    bias = 0.1 * jax.random.normal(kb, (C,), dtype=jnp.float32)

    out = biased_activation(x, bias)
    out = jax.block_until_ready(out)

    # Pure-JAX reference check.
    y_ref = x + bias.reshape(1, C, 1, 1)
    ref = jnp.where(y_ref >= 0, y_ref, NEG_SLOPE * y_ref) * GAIN
    assert out.shape == (N, C, H, W)
    assert jnp.allclose(out, ref, atol=1e-6, rtol=1e-6)

    print("KERNEL_OK")
</pallas_src>

<mosaic_0001>
module attributes {stable_mosaic.version = 11 : i64} {
  func.func @_biased_activation_kernel(%arg0: i32, %arg1: i32, %arg2: memref<8x256xf32, #tpu.memory_space<vmem>>, %arg3: memref<8x1xf32, #tpu.memory_space<vmem>>, %arg4: memref<8x256xf32, #tpu.memory_space<vmem>>) attributes {dimension_semantics = [#tpu.dimension_semantics<parallel>, #tpu.dimension_semantics<parallel>], iteration_bounds = array<i64: 1, 1>, scalar_prefetch = 0 : i64, scratch_operands = 0 : i64, tpu.core_type = #tpu.core_type<tc>, window_params = [{transform_indices = @transform_0, window_bounds = array<i64: 8, 256>}, {transform_indices = @transform_1, window_bounds = array<i64: 8, 1>}, {transform_indices = @transform_2, window_bounds = array<i64: 8, 256>}]} {
    %c0 = arith.constant 0 : index
    %c0_0 = arith.constant 0 : index
    %0 = vector.load %arg2[%c0, %c0_0] : memref<8x256xf32, #tpu.memory_space<vmem>>, vector<8x256xf32>
    %c0_1 = arith.constant 0 : index
    %c0_2 = arith.constant 0 : index
    %1 = vector.load %arg3[%c0_1, %c0_2] : memref<8x1xf32, #tpu.memory_space<vmem>>, vector<8x1xf32>
    %2 = vector.broadcast %1 : vector<8x1xf32> to vector<8x256xf32>
    %3 = arith.addf %0, %2 : vector<8x256xf32>
    %cst = arith.constant 0.000000e+00 : f32
    %4 = vector.broadcast %cst : f32 to vector<8x256xf32>
    %5 = arith.cmpf oge, %3, %4 : vector<8x256xf32>
    %cst_3 = arith.constant 1.38675046 : f32
    %cst_4 = arith.constant 0.277350098 : f32
    %6 = vector.broadcast %cst_3 : f32 to vector<8x256xf32>
    %7 = vector.broadcast %cst_4 : f32 to vector<8x256xf32>
    %8 = arith.select %5, %6, %7 : vector<8x256xi1>, vector<8x256xf32>
    %9 = arith.mulf %3, %8 : vector<8x256xf32>
    %c0_5 = arith.constant 0 : index
    %c0_6 = arith.constant 0 : index
    %10 = vector.load %arg4[%c0_5, %c0_6] : memref<8x256xf32, #tpu.memory_space<vmem>>, vector<8x256xf32>
    tpu.vector_store %arg4[%c0_5, %c0_6], %9 {strides = array<i32>} : memref<8x256xf32, #tpu.memory_space<vmem>>, vector<8x256xf32>,
    return
  }
  func.func @transform_0(%arg0: i32, %arg1: i32) -> (i32, i32) {
    %c0_i32 = arith.constant 0 : i32
    return %arg0, %arg1 : i32, i32
  }
  func.func @transform_1(%arg0: i32, %arg1: i32) -> (i32, i32) {
    %c0_i32 = arith.constant 0 : i32
    %c0_i32_0 = arith.constant 0 : i32
    return %arg0, %c0_i32 : i32, i32
  }
  func.func @transform_2(%arg0: i32, %arg1: i32) -> (i32, i32) {
    %c0_i32 = arith.constant 0 : i32
    return %arg0, %arg1 : i32, i32
  }
}

</mosaic_0001>

<llo_original>
// kernel: tpu_custom_call.1
$region0: #{tpu_custom_call.1}
  #allocation0 [shape = 'u32[]', space=smem, size = 0x4, offset = 0x4, fixed_abs, tag = 'smem constant byte address 0x4 - core index']
  #allocation1 [shape = 'u32[144,128]{1,0:T(1,128)}', space=vmem, size = 0x12000, scoped, tag = 'internal scratch']
  %s0 = inlined_call_operand.hbm [shape: f32[8,256], index: 0, kind: input, shape index: {}]
  %s1 = inlined_call_operand.vmem [shape: f32[8,1], index: 1, kind: input, shape index: {}]
  %s2 = inlined_call_operand.hbm [shape: f32[8,256], index: 2, kind: output, shape index: {}]
  %s3 = sld [smem:[#allocation0]]
  $region22: #{tpu_custom_call.1} parent=0
    _
  %s5 = ssub.s32 1, %s3
  %s6 = scalar_select 0, %s5, %s3
  $region1: #{tpu_custom_call.1} parent=0
    #allocation2 [shape = 'u8[8192]{0}', space=vmem, size = 0x2000, scoped, tag = 'input window, operand 0, single buffered']
    #allocation3 [shape = 's32[1]{0}', space=sflag, size = 0x4, scoped, tag = 'scoped memory for tpu_custom_call.1']
    #allocation4 [shape = 's32[1]{0}', space=sflag, size = 0x4, scoped, tag = 'scoped memory for tpu_custom_call.1']
    #allocation5 [shape = 'u8[8192]{0}', space=vmem, size = 0x2000, scoped, tag = 'output window, operand 0, single buffered']
    %7 = vsyncpa [#allocation3], 0
    %8 = vsyncpa [#allocation4], 0
    // Predicated region
    $region2: #{tpu_custom_call.1} parent=1 // pred_check
      _
    $region3: #{tpu_custom_call.1} parent=1 // pred_check_branch
      %10 = sbr.rel (0) target = $region5
    $region4: #{tpu_custom_call.1} parent=1 // pred_region
      %s12 = ssub.s32 256, 256
      %13 = vsyncadd [#allocation3], %s12
      %s15 = sshll.u32 [#allocation2], 4
      %s16 = int_to_ptr.vmem [resolvable:$true] %s15
      %18 = dma.hbm_to_vmem [thread:$0]  %s0, 256, %s16, [#allocation3]
    $region5: #{tpu_custom_call.1} parent=1 // pred_fallthru
      _
    // Predicated region
    $region6: #{tpu_custom_call.1} parent=1 // pred_check
      _
    $region7: #{tpu_custom_call.1} parent=1 // pred_check_branch
      %20 = sbr.rel (0) target = $region9
    $region8: #{tpu_custom_call.1} parent=1 // pred_region
      _
    $region9: #{tpu_custom_call.1} parent=1 // pred_fallthru
      _
    // Predicated region
    $region10: #{tpu_custom_call.1} parent=1 // pred_check
      _
    $region11: #{tpu_custom_call.1} parent=1 // pred_check_branch
      %22 = sbr.rel (0) target = $region13
    $region12: #{tpu_custom_call.1} parent=1 // pred_region
      %23 = dma.done [#allocation3], 256
    $region13: #{tpu_custom_call.1} parent=1 // pred_fallthru
      _
    %v24 = vld [vmem:[#allocation2] sm:$0xff]
    %v25 = vld [vmem:[#allocation2 + $0x8] sm:$0xff]
    %v26 = vld [vmem:[%s1] sm:$0xff]
    %28 = vset.pattern.permute.xlu0 0
    %29 = vperm.xlu0 %28, %v26
    %v30 = vpop.permute.xlu0 %29
    %v32 = vadd.f32 %v24, %v30
    %v33 = vadd.f32 %v25, %v30
    %vm34 = vcmp.ge.f32.partialorder %v32, 0.0
    %vm35 = vcmp.ge.f32.partialorder %v33, 0.0
    %v36 = vsel %vm34, 1.3867505, 0.2773501
    %v37 = vsel %vm35, 1.3867505, 0.2773501
    %v38 = vmul.f32 %v32, %v36
    %v39 = vmul.f32 %v33, %v37
    %40 = vst [vmem:[#allocation5] sm:$0xff] %v38
    %41 = vst [vmem:[#allocation5 + $0x8] sm:$0xff] %v39
    // Predicated region
    $region14: #{tpu_custom_call.1} parent=1 // pred_check
      _
    $region15: #{tpu_custom_call.1} parent=1 // pred_check_branch
      %43 = sbr.rel (0) target = $region17
    $region16: #{tpu_custom_call.1} parent=1 // pred_region
      %s45 = ssub.s32 256, 256
      %46 = vsyncadd [#allocation4], %s45
      %s48 = sshll.u32 [#allocation5], 4
      %s49 = int_to_ptr.vmem [resolvable:$true] %s48
      %51 = dma.vmem_to_hbm [thread:$0]  %s49, 256, %s2, [#allocation4]
    $region17: #{tpu_custom_call.1} parent=1 // pred_fallthru
      _
    // Predicated region
    $region18: #{tpu_custom_call.1} parent=1 // pred_check
      _
    $region19: #{tpu_custom_call.1} parent=1 // pred_check_branch
      %53 = sbr.rel (0) target = $region21
    $region20: #{tpu_custom_call.1} parent=1 // pred_region
      %54 = dma.done [#allocation4], 256
    $region21: #{tpu_custom_call.1} parent=1 // pred_fallthru
      _
    %55 = vsyncpa [#allocation3], 1
    %56 = vsyncpa [#allocation4], 1

</llo_original>
